<compile_context>
chip_gen: v7x
topology: tpu7x:2x2x1
jax: 0.10.0
libtpu: 0.0.40
codegen_flags: <defaults>
</compile_context>

<pallas_src>
import functools

import jax
import jax.numpy as jnp
from jax.experimental import pallas as pl
from jax.experimental.pallas import tpu as pltpu


def _round_up(n, m):
    return ((n + m - 1) // m) * m


def _gelu(x, approximate=False):
    if approximate:
        # PyTorch nn.GELU(approximate='tanh'); tanh uses the EUP slot.
        c = 0.7978845608028654  # sqrt(2/pi)
        return 0.5 * x * (1.0 + jnp.tanh(c * (x + 0.044715 * x * x * x)))
    # PyTorch nn.GELU() default: 0.5 * x * (1 + erf(x / sqrt(2)))
    return 0.5 * x * (1.0 + jax.lax.erf(x * 0.7071067811865476))


def mlp_kernel(x_ref, w1_ref, b1_ref, w2_ref, b2_ref, w3_ref, b3_ref, o_ref,
               *, approx_gelu):
    # x_ref : (TB, D)  f32   -- native (batch, feature) layout, contiguous DMA slab
    # w1_ref: (H1, D)  bf16  -- PyTorch (out, in) layout, VMEM-resident
    # b1_ref: (H1, 1)  f32
    # w2_ref: (H2, H1) f32
    # b2_ref: (H2, 1)  f32
    # w3_ref: (H2, 1)  f32   -- fc3 weight as a column
    # b3_ref: (1, 1)   f32
    # o_ref : (1, TB)  f32   -- lane-dense logits (transposed)

    # In-kernel bf16 narrowing (VPU cast, hidden under the x-tile DMA).
    x_bf = x_ref[...].astype(jnp.bfloat16)

    # Layer 1: contract over D (last dim of both operands) so the batch lands on
    # lanes: (H1, D) x (TB, D)^T -> (H1, TB), f32 accumulation on the MXU.
    h1 = jax.lax.dot_general(
        w1_ref[...], x_bf,
        dimension_numbers=(((1,), (1,)), ((), ())),
        preferred_element_type=jnp.float32)
    h1 = _gelu(h1 + b1_ref[...], approx_gelu)
    # dropout(p=0.0) == identity

    # Layer 2: tiny (H2, H1) @ (H1, TB) -> (H2, TB), f32.
    h2 = jnp.dot(w2_ref[...], h1, preferred_element_type=jnp.float32)
    h2 = _gelu(h2 + b2_ref[...], approx_gelu)
    # dropout(p=0.0) == identity

    # Layer 3: N=1 matmul is MXU-hostile -> VPU multiply + cross-sublane (XLU) reduce.
    logits = jnp.sum(h2 * w3_ref[...], axis=0, keepdims=True) + b3_ref[...]
    o_ref[...] = logits.astype(o_ref.dtype)


@functools.partial(jax.jit,
                   static_argnames=("block_b", "approx_gelu", "force_pallas"))
def mlp_classifier_forward(x, w1, b1, w2, b2, w3, b3, *, block_b=4096,
                           approx_gelu=False, force_pallas=False):
    """Forward pass of MLPClassifier.

    x  : (B, D) float32
    w1 : (H1, D), b1 : (H1,)   -- PyTorch nn.Linear layout (out, in)
    w2 : (H2, H1), b2 : (H2,)
    w3 : (1, H2),  b3 : (1,)
    returns logits of shape (B, 1) float32.
    """
    B, D = x.shape
    H1 = w1.shape[0]
    H2 = w2.shape[0]

    # Tiny-batch fast path: below one 128-lane tile the padding + launch overhead
    # dominates; a fused XLA matmul chain is faster and exact (f32).
    if B <= 128 and not force_pallas:
        h1 = _gelu(x @ w1.T + b1, approx_gelu)
        h2 = _gelu(h1 @ w2.T + b2, approx_gelu)
        return h2 @ w3.T + b3

    # Batch tile: multiple of 128 lanes, capped by the (padded) batch size so
    # small batches don't over-pad.
    bb = _round_up(max(128, min(block_b, _round_up(B, 128))), 128)
    Bp = _round_up(B, bb)
    # Keep >= 2 grid steps when possible so the "parallel" batch grid can be
    # sharded across v7x's two TensorCores (no effect on v5e/v6e correctness).
    if Bp // bb == 1 and Bp > 128:
        bb = _round_up(Bp // 2, 128)
        Bp = _round_up(B, bb)

    # x stays in its native (B, D) f32 layout; pad rows only when actually needed.
    xp = x if Bp == B else jnp.pad(x, ((0, Bp - B), (0, 0)))

    w1_bf = w1.astype(jnp.bfloat16)                   # (H1, D), VMEM-resident
    b1c = b1.reshape(H1, 1).astype(jnp.float32)
    w2c = w2.astype(jnp.float32)
    b2c = b2.reshape(H2, 1).astype(jnp.float32)
    w3c = w3.reshape(1, H2).T.astype(jnp.float32)     # (H2, 1)
    b3c = b3.reshape(1, 1).astype(jnp.float32)

    # VMEM budget: double-buffered f32 x tile + in-kernel bf16 copy + f32 h1
    # intermediate + double-buffered output + resident weights (+25% headroom).
    weight_bytes = H1 * D * 2 + H1 * 4 + H2 * H1 * 4 + H2 * 4 + H2 * 4 + 4
    vmem_bytes = (2 * bb * D * 4) + (bb * D * 2) + (H1 * bb * 4) + (2 * bb * 4) \
        + weight_bytes
    vmem_limit = int(min(64 << 20, max(32 << 20, vmem_bytes * 5 // 4)))

    grid = (Bp // bb,)
    full = lambda i: (0, 0)  # weights/biases: same (whole) block every grid step

    out_t = pl.pallas_call(
        functools.partial(mlp_kernel, approx_gelu=approx_gelu),
        out_shape=jax.ShapeDtypeStruct((1, Bp), jnp.float32),
        grid_spec=pltpu.PrefetchScalarGridSpec(
            num_scalar_prefetch=0,
            grid=grid,
            in_specs=[
                pl.BlockSpec((bb, D), lambda i: (i, 0)),   # x tile, native layout
                pl.BlockSpec((H1, D), full),               # W1 (bf16)
                pl.BlockSpec((H1, 1), full),               # b1
                pl.BlockSpec((H2, H1), full),              # W2
                pl.BlockSpec((H2, 1), full),               # b2
                pl.BlockSpec((H2, 1), full),               # W3 column
                pl.BlockSpec((1, 1), full),                # b3
            ],
            out_specs=pl.BlockSpec((1, bb), lambda i: (0, i)),
        ),
        compiler_params=pltpu.CompilerParams(
            dimension_semantics=("parallel",),
            vmem_limit_bytes=vmem_limit,
        ),
    )(xp, w1_bf, b1c, w2c, b2c, w3c, b3c)

    # Strip padding and restore the module's (B, 1) output layout (tiny copy).
    return out_t[:, :B].T


def init_linear_params(key, fan_in, fan_out):
    """Deterministic init mimicking nn.Linear defaults: uniform(-1/sqrt(fan_in), ...).

    Returns weight in PyTorch (out, in) layout and bias of shape (out,).
    """
    kw, kb = jax.random.split(key)
    bound = 1.0 / jnp.sqrt(jnp.float32(fan_in))
    w = jax.random.uniform(kw, (fan_out, fan_in), jnp.float32, -bound, bound)
    b = jax.random.uniform(kb, (fan_out,), jnp.float32, -bound, bound)
    return w, b


def reference_forward(x, w1, b1, w2, b2, w3, b3):
    h1 = jax.nn.gelu(x @ w1.T + b1, approximate=False)
    h2 = jax.nn.gelu(h1 @ w2.T + b2, approximate=False)
    return h2 @ w3.T + b3


if __name__ == "__main__":
    # MLPClassifier(input_dim=512, dim_decrease_ratio=8): hid_dim_1=64, hid_dim_2=8,
    # output dim 1.  B=256 keeps the problem small while exercising the Pallas path
    # (two 128-wide batch tiles -> 2 grid steps).
    B, D = 256, 512
    H1 = D // 8
    H2 = H1 // 8

    key = jax.random.PRNGKey(0)
    kx, k1, k2, k3 = jax.random.split(key, 4)

    x = jax.random.normal(kx, (B, D), jnp.float32)
    w1, b1 = init_linear_params(k1, D, H1)      # (64, 512), (64,)
    w2, b2 = init_linear_params(k2, H1, H2)     # (8, 64),  (8,)
    w3, b3 = init_linear_params(k3, H2, 1)      # (1, 8),   (1,)

    out = mlp_classifier_forward(x, w1, b1, w2, b2, w3, b3)
    out = jax.block_until_ready(out)

    ref = reference_forward(x, w1, b1, w2, b2, w3, b3)
    assert out.shape == (B, 1)
    # Layer 1 runs in bf16 (f32 accumulation on the MXU), so tolerance vs the f32
    # reference is relaxed.
    assert jnp.allclose(out, ref, atol=2e-2, rtol=2e-2), "mismatch vs reference"

    print("KERNEL_OK")
</pallas_src>

<mosaic_0001>
module attributes {stable_mosaic.version = 11 : i64} {
  func.func @mlp_kernel(%arg0: i32, %arg1: memref<128x512xf32, #tpu.memory_space<vmem>>, %arg2: memref<64x512xbf16, #tpu.memory_space<vmem>>, %arg3: memref<64x1xf32, #tpu.memory_space<vmem>>, %arg4: memref<8x64xf32, #tpu.memory_space<vmem>>, %arg5: memref<8x1xf32, #tpu.memory_space<vmem>>, %arg6: memref<8x1xf32, #tpu.memory_space<vmem>>, %arg7: memref<1x1xf32, #tpu.memory_space<vmem>>, %arg8: memref<1x128xf32, #tpu.memory_space<vmem>>) attributes {dimension_semantics = [#tpu.dimension_semantics<parallel>], iteration_bounds = array<i64: 2>, scalar_prefetch = 0 : i64, scratch_operands = 0 : i64, tpu.core_type = #tpu.core_type<tc>, window_params = [{transform_indices = @transform_0, window_bounds = array<i64: 128, 512>}, {pipeline_mode = #tpu.pipeline_mode<synchronous>, transform_indices = @transform_1, window_bounds = array<i64: 64, 512>}, {pipeline_mode = #tpu.pipeline_mode<synchronous>, transform_indices = @transform_2, window_bounds = array<i64: 64, 1>}, {pipeline_mode = #tpu.pipeline_mode<synchronous>, transform_indices = @transform_3, window_bounds = array<i64: 8, 64>}, {pipeline_mode = #tpu.pipeline_mode<synchronous>, transform_indices = @transform_4, window_bounds = array<i64: 8, 1>}, {pipeline_mode = #tpu.pipeline_mode<synchronous>, transform_indices = @transform_5, window_bounds = array<i64: 8, 1>}, {pipeline_mode = #tpu.pipeline_mode<synchronous>, transform_indices = @transform_6, window_bounds = array<i64: 1, 1>}, {transform_indices = @transform_7, window_bounds = array<i64: 1, 128>}]} {
    %c0 = arith.constant 0 : index
    %c0_0 = arith.constant 0 : index
    %0 = vector.load %arg1[%c0, %c0_0] : memref<128x512xf32, #tpu.memory_space<vmem>>, vector<128x512xf32>
    %1 = arith.truncf %0 : vector<128x512xf32> to vector<128x512xbf16>
    %c0_1 = arith.constant 0 : index
    %c0_2 = arith.constant 0 : index
    %2 = vector.load %arg2[%c0_1, %c0_2] : memref<64x512xbf16, #tpu.memory_space<vmem>>, vector<64x512xbf16>
    %cst = arith.constant dense<0.000000e+00> : vector<64x128xf32>
    %3 = tpu.matmul %2, %1, %cst {dimension_numbers = #tpu.dot_dimension_numbers<[1], [1], [0], [0], [0, 0, 1, 0], [], []>} : vector<64x512xbf16>, vector<128x512xbf16>, vector<64x128xf32> -> vector<64x128xf32>
    %c0_3 = arith.constant 0 : index
    %c0_4 = arith.constant 0 : index
    %4 = vector.load %arg3[%c0_3, %c0_4] : memref<64x1xf32, #tpu.memory_space<vmem>>, vector<64x1xf32>
    %5 = vector.broadcast %4 : vector<64x1xf32> to vector<64x128xf32>
    %6 = arith.addf %3, %5 : vector<64x128xf32>
    %cst_5 = arith.constant 5.000000e-01 : f32
    %7 = vector.broadcast %cst_5 : f32 to vector<64x128xf32>
    %8 = arith.mulf %7, %6 : vector<64x128xf32>
    %cst_6 = arith.constant 0.707106769 : f32
    %9 = vector.broadcast %cst_6 : f32 to vector<64x128xf32>
    %10 = arith.mulf %6, %9 : vector<64x128xf32>
    %11 = math.erf %10 : vector<64x128xf32>
    %cst_7 = arith.constant 1.000000e+00 : f32
    %12 = vector.broadcast %cst_7 : f32 to vector<64x128xf32>
    %13 = arith.addf %12, %11 : vector<64x128xf32>
    %14 = arith.mulf %8, %13 : vector<64x128xf32>
    %c0_8 = arith.constant 0 : index
    %c0_9 = arith.constant 0 : index
    %15 = vector.load %arg4[%c0_8, %c0_9] : memref<8x64xf32, #tpu.memory_space<vmem>>, vector<8x64xf32>
    %cst_10 = arith.constant dense<0.000000e+00> : vector<8x128xf32>
    %16 = tpu.matmul %15, %14, %cst_10 {dimension_numbers = #tpu.dot_dimension_numbers<[1], [0], [0], [1], [0, 0, 1, 1], [], []>} : vector<8x64xf32>, vector<64x128xf32>, vector<8x128xf32> -> vector<8x128xf32>
    %c0_11 = arith.constant 0 : index
    %c0_12 = arith.constant 0 : index
    %17 = vector.load %arg5[%c0_11, %c0_12] : memref<8x1xf32, #tpu.memory_space<vmem>>, vector<8x1xf32>
    %18 = vector.broadcast %17 : vector<8x1xf32> to vector<8x128xf32>
    %19 = arith.addf %16, %18 : vector<8x128xf32>
    %cst_13 = arith.constant 5.000000e-01 : f32
    %20 = vector.broadcast %cst_13 : f32 to vector<8x128xf32>
    %21 = arith.mulf %20, %19 : vector<8x128xf32>
    %cst_14 = arith.constant 0.707106769 : f32
    %22 = vector.broadcast %cst_14 : f32 to vector<8x128xf32>
    %23 = arith.mulf %19, %22 : vector<8x128xf32>
    %24 = math.erf %23 : vector<8x128xf32>
    %cst_15 = arith.constant 1.000000e+00 : f32
    %25 = vector.broadcast %cst_15 : f32 to vector<8x128xf32>
    %26 = arith.addf %25, %24 : vector<8x128xf32>
    %27 = arith.mulf %21, %26 : vector<8x128xf32>
    %c0_16 = arith.constant 0 : index
    %c0_17 = arith.constant 0 : index
    %28 = vector.load %arg6[%c0_16, %c0_17] : memref<8x1xf32, #tpu.memory_space<vmem>>, vector<8x1xf32>
    %29 = vector.broadcast %28 : vector<8x1xf32> to vector<8x128xf32>
    %30 = arith.mulf %27, %29 : vector<8x128xf32>
    %cst_18 = arith.constant dense<0.000000e+00> : vector<128xf32>
    %31 = vector.multi_reduction <add>, %30, %cst_18 [0] : vector<8x128xf32> to vector<128xf32>
    %32 = vector.shape_cast %31 : vector<128xf32> to vector<1x128xf32>
    %c0_19 = arith.constant 0 : index
    %c0_20 = arith.constant 0 : index
    %33 = vector.load %arg7[%c0_19, %c0_20] : memref<1x1xf32, #tpu.memory_space<vmem>>, vector<1x1xf32>
    %34 = vector.broadcast %33 : vector<1x1xf32> to vector<1x128xf32>
    %35 = arith.addf %32, %34 : vector<1x128xf32>
    %c0_21 = arith.constant 0 : index
    %c0_22 = arith.constant 0 : index
    %36 = vector.load %arg8[%c0_21, %c0_22] : memref<1x128xf32, #tpu.memory_space<vmem>>, vector<1x128xf32>
    tpu.vector_store %arg8[%c0_21, %c0_22], %35 {strides = array<i32>} : memref<1x128xf32, #tpu.memory_space<vmem>>, vector<1x128xf32>,
    return
  }
  func.func @transform_0(%arg0: i32) -> (i32, i32) {
    %c0_i32 = arith.constant 0 : i32
    %c0_i32_0 = arith.constant 0 : i32
    return %arg0, %c0_i32 : i32, i32
  }
  func.func @transform_1(%arg0: i32) -> (i32, i32) {
    %c0_i32 = arith.constant 0 : i32
    %c0_i32_0 = arith.constant 0 : i32
    %c0_i32_1 = arith.constant 0 : i32
    return %c0_i32, %c0_i32_0 : i32, i32
  }
  func.func @transform_2(%arg0: i32) -> (i32, i32) {
    %c0_i32 = arith.constant 0 : i32
    %c0_i32_0 = arith.constant 0 : i32
    %c0_i32_1 = arith.constant 0 : i32
    return %c0_i32, %c0_i32_0 : i32, i32
  }
  func.func @transform_3(%arg0: i32) -> (i32, i32) {
    %c0_i32 = arith.constant 0 : i32
    %c0_i32_0 = arith.constant 0 : i32
    %c0_i32_1 = arith.constant 0 : i32
    return %c0_i32, %c0_i32_0 : i32, i32
  }
  func.func @transform_4(%arg0: i32) -> (i32, i32) {
    %c0_i32 = arith.constant 0 : i32
    %c0_i32_0 = arith.constant 0 : i32
    %c0_i32_1 = arith.constant 0 : i32
    return %c0_i32, %c0_i32_0 : i32, i32
  }
  func.func @transform_5(%arg0: i32) -> (i32, i32) {
    %c0_i32 = arith.constant 0 : i32
    %c0_i32_0 = arith.constant 0 : i32
    %c0_i32_1 = arith.constant 0 : i32
    return %c0_i32, %c0_i32_0 : i32, i32
  }
  func.func @transform_6(%arg0: i32) -> (i32, i32) {
    %c0_i32 = arith.constant 0 : i32
    %c0_i32_0 = arith.constant 0 : i32
    %c0_i32_1 = arith.constant 0 : i32
    return %c0_i32, %c0_i32_0 : i32, i32
  }
  func.func @transform_7(%arg0: i32) -> (i32, i32) {
    %c0_i32 = arith.constant 0 : i32
    %c0_i32_0 = arith.constant 0 : i32
    return %c0_i32, %arg0 : i32, i32
  }
}

</mosaic_0001>

<llo_original>
// kernel: mlp_classifier_forward.1
$region0: #{mlp_classifier_forward.1}
  #allocation0 [shape = 'u32[]', space=smem, size = 0x4, offset = 0x4, fixed_abs, tag = 'smem constant byte address 0x4 - core index']
  #allocation1 [shape = 'u32[144,128]{1,0:T(1,128)}', space=vmem, size = 0x12000, scoped, tag = 'internal scratch']
  #allocation2 [shape = 'f32[1,1]{1,0:T(1,128)S(1)}', space=vmem, size = 0x200, scoped, tag = 'scoped memory for mlp_classifier_forward.1']
  %s0 = inlined_call_operand.hbm [shape: f32[256,512], index: 0, kind: input, shape index: {}]
  %s1 = inlined_call_operand.vmem [shape: bf16[64,512], index: 1, kind: input, shape index: {}]
  %s2 = inlined_call_operand.vmem [shape: f32[64,1], index: 2, kind: input, shape index: {}]
  %s3 = inlined_call_operand.vmem [shape: f32[8,64], index: 3, kind: input, shape index: {}]
  %s4 = inlined_call_operand.vmem [shape: f32[8,1], index: 4, kind: input, shape index: {}]
  %s5 = inlined_call_operand.vmem [shape: f32[8,1], index: 5, kind: input, shape index: {}]
  %s6 = inlined_call_operand.<no memory space> [shape: f32[1,1], index: 6, kind: input, shape index: {}]
  %s7 = inlined_call_operand.hbm [shape: f32[1,256], index: 7, kind: output, shape index: {}]
  %s8 = sld [smem:[#allocation0]]
  $region65: #{mlp_classifier_forward.1} parent=0
    _
  %s10 = ssub.s32 1, %s8
  %s11 = scalar_select 0, %s10, %s8
  %v12 = vstv %s6
  %13 = vst [vmem:[#allocation2] sm:$0x1] %v12
  $region1: #{mlp_classifier_forward.1} parent=0
    #allocation3 [shape = 'u8[524288]{0}', space=vmem, size = 0x80000, scoped, tag = 'input window, operand 0']
    #allocation4 [shape = 's32[2]{0}', space=sflag, size = 0x8, scoped, tag = 'scoped memory for mlp_classifier_forward.1']
    #allocation5 [shape = 's32[2]{0}', space=sflag, size = 0x8, scoped, tag = 'scoped memory for mlp_classifier_forward.1']
    #allocation6 [shape = 'u8[1024]{0}', space=vmem, size = 0x400, scoped, tag = 'output window, operand 0']
    %14 = vsyncpa [#allocation4], 0
    %s15 = scalar_lea.sflag [#allocation4], 1
    %16 = vsyncpa %s15, 0
    %17 = vsyncpa [#allocation5], 0
    %s18 = scalar_lea.sflag [#allocation5], 1
    %19 = vsyncpa %s18, 0
    loop: start=0, step=1, limit=4
    $region2: #{mlp_classifier_forward.1} parent=1 // loop_pre_header
      _
    $region3: #{mlp_classifier_forward.1} parent=1 // loop_header
      %s21 = sphi 0, %s25
      %p22 = scmp.ge.s32.totalorder %s21, 4
      %s31 = sphi 0, %s33
      %s34 = sphi 0, %s31
      %s35 = sphi 0, %s34
      %s51 = sphi 0, %s35
      %s55 = sphi 0, %s55
      %s57 = sphi 0, %s55
      %s58 = sphi 0, %s57
      %s72 = sphi 0, %s58
      %s76 = sphi 0, %s76
      %s78 = sphi 0, %s76
      %s79 = sphi 0, %s78
      %s93 = sphi 0, %s79
      %s97 = sphi 0, %s97
      %s99 = sphi 0, %s97
      %s100 = sphi 0, %s99
      %s114 = sphi 0, %s100
      %s118 = sphi 0, %s118
      %s120 = sphi 0, %s118
      %s121 = sphi 0, %s120
      %s135 = sphi 0, %s121
      %s139 = sphi 0, %s139
      %s141 = sphi 0, %s139
      %s142 = sphi 0, %s141
      %s156 = sphi 0, %s142
      %s160 = sphi 0, %s160
      %s162 = sphi 0, %s160
      %s163 = sphi 0, %s162
      %s177 = sphi 0, %s163
      %s183 = sphi 0, %s185
      %s186 = sphi 0, %s183
      %s187 = sphi 0, %s186
      %s203 = sphi 0, %s187
    $region4: #{mlp_classifier_forward.1} parent=1 // loop_header_branch
      %24 = sbr.rel (%p22) target = $region8
    $region5: #{mlp_classifier_forward.1} parent=1 // loop_body
      %s26 = ssub.s32 %s21, 1
      %s27 = ssub.s32 %s21, 2
      %s28 = sadd.s32 %s21, 1
      %s29 = ssub.s32 %s21, %s28
      %p30 = scmp.eq.s32.totalorder %s29, 0
      %s32 = sadd.s32 %s31, 1
      %s33 = scalar_select %p30, %s31, %s32
      %p36 = pneg %p30
      %p37 = scmp.eq.s32.totalorder %s21, 1
      %p38 = por %p36, %p37
      %p39 = scmp.ne.s32.totalorder %s31, %s34
      %p40 = scmp.eq.s32.totalorder %s21, 0
      %p41 = por %p39, %p40
      %p42 = scmp.ne.s32.totalorder %s31, %s34
      %p43 = scmp.eq.s32.totalorder %s26, 1
      %p44 = por %p42, %p43
      %p45 = scmp.ne.s32.totalorder %s34, %s35
      %p46 = scmp.eq.s32.totalorder %s26, 0
      %p47 = por %p45, %p46
      %p48 = scmp.ne.s32.totalorder %s34, %s35
      %p49 = scmp.eq.s32.totalorder %s27, 1
      %p50 = por %p48, %p49
      %p52 = scmp.ne.s32.totalorder %s35, %s51
      %p53 = scmp.eq.s32.totalorder %s27, 0
      %p54 = por %p52, %p53
      %s56 = sadd.s32 %s55, 1
      %p59 = scmp.eq.s32.totalorder %s21, 1
      %p60 = scmp.ne.s32.totalorder %s55, %s57
      %p61 = scmp.eq.s32.totalorder %s21, 0
      %p62 = por %p60, %p61
      %p63 = scmp.ne.s32.totalorder %s55, %s57
      %p64 = scmp.eq.s32.totalorder %s26, 1
      %p65 = por %p63, %p64
      %p66 = scmp.ne.s32.totalorder %s57, %s58
      %p67 = scmp.eq.s32.totalorder %s26, 0
      %p68 = por %p66, %p67
      %p69 = scmp.ne.s32.totalorder %s57, %s58
      %p70 = scmp.eq.s32.totalorder %s27, 1
      %p71 = por %p69, %p70
      %p73 = scmp.ne.s32.totalorder %s58, %s72
      %p74 = scmp.eq.s32.totalorder %s27, 0
      %p75 = por %p73, %p74
      %s77 = sadd.s32 %s76, 1
      %p80 = scmp.eq.s32.totalorder %s21, 1
      %p81 = scmp.ne.s32.totalorder %s76, %s78
      %p82 = scmp.eq.s32.totalorder %s21, 0
      %p83 = por %p81, %p82
      %p84 = scmp.ne.s32.totalorder %s76, %s78
      %p85 = scmp.eq.s32.totalorder %s26, 1
      %p86 = por %p84, %p85
      %p87 = scmp.ne.s32.totalorder %s78, %s79
      %p88 = scmp.eq.s32.totalorder %s26, 0
      %p89 = por %p87, %p88
      %p90 = scmp.ne.s32.totalorder %s78, %s79
      %p91 = scmp.eq.s32.totalorder %s27, 1
      %p92 = por %p90, %p91
      %p94 = scmp.ne.s32.totalorder %s79, %s93
      %p95 = scmp.eq.s32.totalorder %s27, 0
      %p96 = por %p94, %p95
      %s98 = sadd.s32 %s97, 1
      %p101 = scmp.eq.s32.totalorder %s21, 1
      %p102 = scmp.ne.s32.totalorder %s97, %s99
      %p103 = scmp.eq.s32.totalorder %s21, 0
      %p104 = por %p102, %p103
      %p105 = scmp.ne.s32.totalorder %s97, %s99
      %p106 = scmp.eq.s32.totalorder %s26, 1
      %p107 = por %p105, %p106
      %p108 = scmp.ne.s32.totalorder %s99, %s100
      %p109 = scmp.eq.s32.totalorder %s26, 0
      %p110 = por %p108, %p109
      %p111 = scmp.ne.s32.totalorder %s99, %s100
      %p112 = scmp.eq.s32.totalorder %s27, 1
      %p113 = por %p111, %p112
      %p115 = scmp.ne.s32.totalorder %s100, %s114
      %p116 = scmp.eq.s32.totalorder %s27, 0
      %p117 = por %p115, %p116
      %s119 = sadd.s32 %s118, 1
      %p122 = scmp.eq.s32.totalorder %s21, 1
      %p123 = scmp.ne.s32.totalorder %s118, %s120
      %p124 = scmp.eq.s32.totalorder %s21, 0
      %p125 = por %p123, %p124
      %p126 = scmp.ne.s32.totalorder %s118, %s120
      %p127 = scmp.eq.s32.totalorder %s26, 1
      %p128 = por %p126, %p127
      %p129 = scmp.ne.s32.totalorder %s120, %s121
      %p130 = scmp.eq.s32.totalorder %s26, 0
      %p131 = por %p129, %p130
      %p132 = scmp.ne.s32.totalorder %s120, %s121
      %p133 = scmp.eq.s32.totalorder %s27, 1
      %p134 = por %p132, %p133
      %p136 = scmp.ne.s32.totalorder %s121, %s135
      %p137 = scmp.eq.s32.totalorder %s27, 0
      %p138 = por %p136, %p137
      %s140 = sadd.s32 %s139, 1
      %p143 = scmp.eq.s32.totalorder %s21, 1
      %p144 = scmp.ne.s32.totalorder %s139, %s141
      %p145 = scmp.eq.s32.totalorder %s21, 0
      %p146 = por %p144, %p145
      %p147 = scmp.ne.s32.totalorder %s139, %s141
      %p148 = scmp.eq.s32.totalorder %s26, 1
      %p149 = por %p147, %p148
      %p150 = scmp.ne.s32.totalorder %s141, %s142
      %p151 = scmp.eq.s32.totalorder %s26, 0
      %p152 = por %p150, %p151
      %p153 = scmp.ne.s32.totalorder %s141, %s142
      %p154 = scmp.eq.s32.totalorder %s27, 1
      %p155 = por %p153, %p154
      %p157 = scmp.ne.s32.totalorder %s142, %s156
      %p158 = scmp.eq.s32.totalorder %s27, 0
      %p159 = por %p157, %p158
      %s161 = sadd.s32 %s160, 1
      %p164 = scmp.eq.s32.totalorder %s21, 1
      %p165 = scmp.ne.s32.totalorder %s160, %s162
      %p166 = scmp.eq.s32.totalorder %s21, 0
      %p167 = por %p165, %p166
      %p168 = scmp.ne.s32.totalorder %s160, %s162
      %p169 = scmp.eq.s32.totalorder %s26, 1
      %p170 = por %p168, %p169
      %p171 = scmp.ne.s32.totalorder %s162, %s163
      %p172 = scmp.eq.s32.totalorder %s26, 0
      %p173 = por %p171, %p172
      %p174 = scmp.ne.s32.totalorder %s162, %s163
      %p175 = scmp.eq.s32.totalorder %s27, 1
      %p176 = por %p174, %p175
      %p178 = scmp.ne.s32.totalorder %s163, %s177
      %p179 = scmp.eq.s32.totalorder %s27, 0
      %p180 = por %p178, %p179
      %s181 = ssub.s32 %s21, %s28
      %p182 = scmp.eq.s32.totalorder %s181, 0
      %s184 = sadd.s32 %s183, 1
      %s185 = scalar_select %p182, %s183, %s184
      %p188 = pneg %p182
      %p189 = scmp.eq.s32.totalorder %s21, 1
      %p190 = por %p188, %p189
      %p191 = scmp.ne.s32.totalorder %s183, %s186
      %p192 = scmp.eq.s32.totalorder %s21, 0
      %p193 = por %p191, %p192
      %p194 = scmp.ne.s32.totalorder %s183, %s186
      %p195 = scmp.eq.s32.totalorder %s26, 1
      %p196 = por %p194, %p195
      %p197 = scmp.ne.s32.totalorder %s186, %s187
      %p198 = scmp.eq.s32.totalorder %s26, 0
      %p199 = por %p197, %p198
      %p200 = scmp.ne.s32.totalorder %s186, %s187
      %p201 = scmp.eq.s32.totalorder %s27, 1
      %p202 = por %p200, %p201
      %p204 = scmp.ne.s32.totalorder %s187, %s203
      %p205 = scmp.eq.s32.totalorder %s27, 0
      %p206 = por %p204, %p205
      %p207 = scmp.le.s32.totalorder 1, %s21
      %p208 = scmp.lt.s32.totalorder %s21, 3
      %p209 = pnand %p207, %p208
      %p210 = pneg %p209
      // Predicated region
      $region9: #{mlp_classifier_forward.1} parent=5 // pred_check
        _
      $region10: #{mlp_classifier_forward.1} parent=5 // pred_check_branch
        %212 = sbr.rel (%p209) target = $region12
      $region11: #{mlp_classifier_forward.1} parent=5 // pred_region
        %s213 = ssub.s32 %s21, 1
        // Predicated region
        $region13: #{mlp_classifier_forward.1} parent=11 // pred_check
          %p214 = pneg %p68
        $region14: #{mlp_classifier_forward.1} parent=11 // pred_check_branch
          %216 = sbr.rel (%p214) target = $region16
        $region15: #{mlp_classifier_forward.1} parent=11 // pred_region
          _
        $region16: #{mlp_classifier_forward.1} parent=11 // pred_fallthru
          _
        // Predicated region
        $region17: #{mlp_classifier_forward.1} parent=11 // pred_check
          %p217 = pneg %p89
        $region18: #{mlp_classifier_forward.1} parent=11 // pred_check_branch
          %219 = sbr.rel (%p217) target = $region20
        $region19: #{mlp_classifier_forward.1} parent=11 // pred_region
          _
        $region20: #{mlp_classifier_forward.1} parent=11 // pred_fallthru
          _
        // Predicated region
        $region21: #{mlp_classifier_forward.1} parent=11 // pred_check
          %p220 = pneg %p110
        $region22: #{mlp_classifier_forward.1} parent=11 // pred_check_branch
          %222 = sbr.rel (%p220) target = $region24
        $region23: #{mlp_classifier_forward.1} parent=11 // pred_region
          _
        $region24: #{mlp_classifier_forward.1} parent=11 // pred_fallthru
          _
        // Predicated region
        $region25: #{mlp_classifier_forward.1} parent=11 // pred_check
          %p223 = pneg %p131
        $region26: #{mlp_classifier_forward.1} parent=11 // pred_check_branch
          %225 = sbr.rel (%p223) target = $region28
        $region27: #{mlp_classifier_forward.1} parent=11 // pred_region
          _
        $region28: #{mlp_classifier_forward.1} parent=11 // pred_fallthru
          _
        // Predicated region
        $region29: #{mlp_classifier_forward.1} parent=11 // pred_check
          %p226 = pneg %p152
        $region30: #{mlp_classifier_forward.1} parent=11 // pred_check_branch
          %228 = sbr.rel (%p226) target = $region32
        $region31: #{mlp_classifier_forward.1} parent=11 // pred_region
          _
        $region32: #{mlp_classifier_forward.1} parent=11 // pred_fallthru
          _
        // Predicated region
        $region33: #{mlp_classifier_forward.1} parent=11 // pred_check
          %p229 = pneg %p173
        $region34: #{mlp_classifier_forward.1} parent=11 // pred_check_branch
          %231 = sbr.rel (%p229) target = $region36
        $region35: #{mlp_classifier_forward.1} parent=11 // pred_region
          _
        $region36: #{mlp_classifier_forward.1} parent=11 // pred_fallthru
          _
      $region12: #{mlp_classifier_forward.1} parent=5 // pred_fallthru
        _
      %p232 = scmp.lt.s32.totalorder %s21, 2
      // Predicated region
      $region37: #{mlp_classifier_forward.1} parent=5 // pred_check
        %p233 = pneg %p232
      $region38: #{mlp_classifier_forward.1} parent=5 // pred_check_branch
        %235 = sbr.rel (%p233) target = $region40
      $region39: #{mlp_classifier_forward.1} parent=5 // pred_region
        // Predicated region
        $region41: #{mlp_classifier_forward.1} parent=39 // pred_check
          %p236 = pneg %p41
        $region42: #{mlp_classifier_forward.1} parent=39 // pred_check_branch
          %238 = sbr.rel (%p236) target = $region44
        $region43: #{mlp_classifier_forward.1} parent=39 // pred_region
          %s239 = sand.u32 %s31, 1
          %s240 = scalar_lea.sflag [#allocation4], %s239
          %s241 = sand.u32 %s31, 1
          %s242 = smul.addr %s241, 512
          %s243 = scalar_lea.vmem [#allocation3], %s242
          %s244 = smul.u32 16, %s21
          %s246 = ssub.s32 8192, 8192
          %247 = vsyncadd %s240, %s246
          %s248 = smul.addr %s244, 4
          %s249 = smul.addr %s248, 128
          %s250 = scalar_lea.hbm %s0, %s249
          %s251 = sshll.u32 %s243, 4
          %s252 = int_to_ptr.vmem [resolvable:$true] %s251
          %257 = dma.hbm_to_vmem [thread:$0]  %s250, 8192, %s252, %s240, 512, 512, 32
        $region44: #{mlp_classifier_forward.1} parent=39 // pred_fallthru
          _
      $region40: #{mlp_classifier_forward.1} parent=5 // pred_fallthru
        _
      %p258 = scmp.le.s32.totalorder 1, %s21
      %p259 = scmp.lt.s32.totalorder %s21, 3
      %p260 = pnand %p258, %p259
      %p261 = pneg %p260
      // Predicated region
      $region45: #{mlp_classifier_forward.1} parent=5 // pred_check
        _
      $region46: #{mlp_classifier_forward.1} parent=5 // pred_check_branch
        %263 = sbr.rel (%p260) target = $region48
      $region47: #{mlp_classifier_forward.1} parent=5 // pred_region
        %s264 = ssub.s32 %s21, 1
        %s265 = sand.u32 %s34, 1
        %s266 = scalar_lea.sflag [#allocation4], %s265
        %s267 = sand.u32 %s34, 1
        %s268 = smul.addr %s267, 512
        %s269 = scalar_lea.vmem [#allocation3], %s268
        // Predicated region
        $region49: #{mlp_classifier_forward.1} parent=47 // pred_check
          %p270 = pneg %p47
        $region50: #{mlp_classifier_forward.1} parent=47 // pred_check_branch
          %272 = sbr.rel (%p270) target = $region52
        $region51: #{mlp_classifier_forward.1} parent=47 // pred_region
          %273 = dma.done %s266, 8192
        $region52: #{mlp_classifier_forward.1} parent=47 // pred_fallthru
          _
        %s274 = sand.u32 %s34, 1
        %s275 = scalar_lea.sflag [#allocation4], %s274
        %s276 = sand.u32 %s34, 1
        %s277 = smul.addr %s276, 512
        %s278 = scalar_lea.vmem [#allocation3], %s277
        %p279 = pneg %p47
        %p280 = pneg %p44
        %p281 = pneg %p68
        %p282 = pneg %p65
        %p283 = pneg %p89
        %p284 = pneg %p86
        %p285 = pneg %p110
        %p286 = pneg %p107
        %p287 = pneg %p131
        %p288 = pneg %p128
        %p289 = pneg %p152
        %p290 = pneg %p149
        %p291 = pneg %p173
        %p292 = pneg %p170
        %p293 = pneg %p199
        %p294 = pneg %p196
        %s295 = sand.u32 %s186, 1
        %s296 = scalar_lea.sflag [#allocation5], %s295
        %s297 = sand.u32 %s186, 1
        %s298 = scalar_lea.vmem [#allocation6], %s297
        %s299 = smul.u32 16, %s26
        %v301 = vld [vmem:[%s269] sm:$0xff]
        %v302 = vld [vmem:[%s269 + $0x8] sm:$0xff]
        %v303 = vld [vmem:[%s269 + $0x10] sm:$0xff]
        %v304 = vld [vmem:[%s269 + $0x18] sm:$0xff]
        %v305 = vld [vmem:[%s269 + $0x20] sm:$0xff]
        %v306 = vld [vmem:[%s269 + $0x28] sm:$0xff]
        %v307 = vld [vmem:[%s269 + $0x30] sm:$0xff]
        %v308 = vld [vmem:[%s269 + $0x38] sm:$0xff]
        %v309 = vld [vmem:[%s269 + $0x40] sm:$0xff]
        %v310 = vld [vmem:[%s269 + $0x48] sm:$0xff]
        %v311 = vld [vmem:[%s269 + $0x50] sm:$0xff]
        %v312 = vld [vmem:[%s269 + $0x58] sm:$0xff]
        %v313 = vld [vmem:[%s269 + $0x60] sm:$0xff]
        %v314 = vld [vmem:[%s269 + $0x68] sm:$0xff]
        %v315 = vld [vmem:[%s269 + $0x70] sm:$0xff]
        %v316 = vld [vmem:[%s269 + $0x78] sm:$0xff]
        %v317 = vld [vmem:[%s269 + $0x80] sm:$0xff]
        %v318 = vld [vmem:[%s269 + $0x88] sm:$0xff]
        %v319 = vld [vmem:[%s269 + $0x90] sm:$0xff]
        %v320 = vld [vmem:[%s269 + $0x98] sm:$0xff]
        %v321 = vld [vmem:[%s269 + $0xa0] sm:$0xff]
        %v322 = vld [vmem:[%s269 + $0xa8] sm:$0xff]
        %v323 = vld [vmem:[%s269 + $0xb0] sm:$0xff]
        %v324 = vld [vmem:[%s269 + $0xb8] sm:$0xff]
        %v325 = vld [vmem:[%s269 + $0xc0] sm:$0xff]
        %v326 = vld [vmem:[%s269 + $0xc8] sm:$0xff]
        %v327 = vld [vmem:[%s269 + $0xd0] sm:$0xff]
        %v328 = vld [vmem:[%s269 + $0xd8] sm:$0xff]
        %v329 = vld [vmem:[%s269 + $0xe0] sm:$0xff]
        %v330 = vld [vmem:[%s269 + $0xe8] sm:$0xff]
        %v331 = vld [vmem:[%s269 + $0xf0] sm:$0xff]
        %v332 = vld [vmem:[%s269 + $0xf8] sm:$0xff]
        %v333 = vld [vmem:[%s269 + $0x100] sm:$0xff]
        %v334 = vld [vmem:[%s269 + $0x108] sm:$0xff]
        %v335 = vld [vmem:[%s269 + $0x110] sm:$0xff]
        %v336 = vld [vmem:[%s269 + $0x118] sm:$0xff]
        %v337 = vld [vmem:[%s269 + $0x120] sm:$0xff]
        %v338 = vld [vmem:[%s269 + $0x128] sm:$0xff]
        %v339 = vld [vmem:[%s269 + $0x130] sm:$0xff]
        %v340 = vld [vmem:[%s269 + $0x138] sm:$0xff]
        %v341 = vld [vmem:[%s269 + $0x140] sm:$0xff]
        %v342 = vld [vmem:[%s269 + $0x148] sm:$0xff]
        %v343 = vld [vmem:[%s269 + $0x150] sm:$0xff]
        %v344 = vld [vmem:[%s269 + $0x158] sm:$0xff]
        %v345 = vld [vmem:[%s269 + $0x160] sm:$0xff]
        %v346 = vld [vmem:[%s269 + $0x168] sm:$0xff]
        %v347 = vld [vmem:[%s269 + $0x170] sm:$0xff]
        %v348 = vld [vmem:[%s269 + $0x178] sm:$0xff]
        %v349 = vld [vmem:[%s269 + $0x180] sm:$0xff]
        %v350 = vld [vmem:[%s269 + $0x188] sm:$0xff]
        %v351 = vld [vmem:[%s269 + $0x190] sm:$0xff]
        %v352 = vld [vmem:[%s269 + $0x198] sm:$0xff]
        %v353 = vld [vmem:[%s269 + $0x1a0] sm:$0xff]
        %v354 = vld [vmem:[%s269 + $0x1a8] sm:$0xff]
        %v355 = vld [vmem:[%s269 + $0x1b0] sm:$0xff]
        %v356 = vld [vmem:[%s269 + $0x1b8] sm:$0xff]
        %v357 = vld [vmem:[%s269 + $0x1c0] sm:$0xff]
        %v358 = vld [vmem:[%s269 + $0x1c8] sm:$0xff]
        %v359 = vld [vmem:[%s269 + $0x1d0] sm:$0xff]
        %v360 = vld [vmem:[%s269 + $0x1d8] sm:$0xff]
        %v361 = vld [vmem:[%s269 + $0x1e0] sm:$0xff]
        %v362 = vld [vmem:[%s269 + $0x1e8] sm:$0xff]
        %v363 = vld [vmem:[%s269 + $0x1f0] sm:$0xff]
        %v364 = vld [vmem:[%s269 + $0x1f8] sm:$0xff]
        %v365 = vpack.c.bf16 %v305, %v301
        %v366 = vpack.c.bf16 %v306, %v302
        %v367 = vpack.c.bf16 %v307, %v303
        %v368 = vpack.c.bf16 %v308, %v304
        %v369 = vpack.c.bf16 %v313, %v309
        %v370 = vpack.c.bf16 %v314, %v310
        %v371 = vpack.c.bf16 %v315, %v311
        %v372 = vpack.c.bf16 %v316, %v312
        %v373 = vpack.c.bf16 %v321, %v317
        %v374 = vpack.c.bf16 %v322, %v318
        %v375 = vpack.c.bf16 %v323, %v319
        %v376 = vpack.c.bf16 %v324, %v320
        %v377 = vpack.c.bf16 %v329, %v325
        %v378 = vpack.c.bf16 %v330, %v326
        %v379 = vpack.c.bf16 %v331, %v327
        %v380 = vpack.c.bf16 %v332, %v328
        %v381 = vpack.c.bf16 %v337, %v333
        %v382 = vpack.c.bf16 %v338, %v334
        %v383 = vpack.c.bf16 %v339, %v335
        %v384 = vpack.c.bf16 %v340, %v336
        %v385 = vpack.c.bf16 %v345, %v341
        %v386 = vpack.c.bf16 %v346, %v342
        %v387 = vpack.c.bf16 %v347, %v343
        %v388 = vpack.c.bf16 %v348, %v344
        %v389 = vpack.c.bf16 %v353, %v349
        %v390 = vpack.c.bf16 %v354, %v350
        %v391 = vpack.c.bf16 %v355, %v351
        %v392 = vpack.c.bf16 %v356, %v352
        %v393 = vpack.c.bf16 %v361, %v357
        %v394 = vpack.c.bf16 %v362, %v358
        %v395 = vpack.c.bf16 %v363, %v359
        %v396 = vpack.c.bf16 %v364, %v360
        %v397 = vld [vmem:[%s1] sm:$0xff]
        %v398 = vld [vmem:[%s1 + $0x8] sm:$0xff]
        %v399 = vld [vmem:[%s1 + $0x10] sm:$0xff]
        %v400 = vld [vmem:[%s1 + $0x18] sm:$0xff]
        %v401 = vld [vmem:[%s1 + $0x20] sm:$0xff]
        %v402 = vld [vmem:[%s1 + $0x28] sm:$0xff]
        %v403 = vld [vmem:[%s1 + $0x30] sm:$0xff]
        %v404 = vld [vmem:[%s1 + $0x38] sm:$0xff]
        %v405 = vld [vmem:[%s1 + $0x40] sm:$0xff]
        %v406 = vld [vmem:[%s1 + $0x48] sm:$0xff]
        %v407 = vld [vmem:[%s1 + $0x50] sm:$0xff]
        %v408 = vld [vmem:[%s1 + $0x58] sm:$0xff]
        %v409 = vld [vmem:[%s1 + $0x60] sm:$0xff]
        %v410 = vld [vmem:[%s1 + $0x68] sm:$0xff]
        %v411 = vld [vmem:[%s1 + $0x70] sm:$0xff]
        %v412 = vld [vmem:[%s1 + $0x78] sm:$0xff]
        %v413 = vld [vmem:[%s2] sm:$0xff]
        %v414 = vld [vmem:[%s2 + $0x8] sm:$0xff]
        %v415 = vld [vmem:[%s2 + $0x10] sm:$0xff]
        %v416 = vld [vmem:[%s2 + $0x18] sm:$0xff]
        %v417 = vld [vmem:[%s2 + $0x20] sm:$0xff]
        %v418 = vld [vmem:[%s2 + $0x28] sm:$0xff]
        %v419 = vld [vmem:[%s2 + $0x30] sm:$0xff]
        %v420 = vld [vmem:[%s2 + $0x38] sm:$0xff]
        %422 = vset.pattern.permute.xlu0 0
        %423 = vperm.xlu0 %422, %v413
        %v424 = vpop.permute.xlu0 %423
        %427 = vset.pattern.permute.xlu0 0
        %428 = vperm.xlu0 %427, %v414
        %v429 = vpop.permute.xlu0 %428
        %432 = vset.pattern.permute.xlu0 0
        %433 = vperm.xlu0 %432, %v415
        %v434 = vpop.permute.xlu0 %433
        %437 = vset.pattern.permute.xlu0 0
        %438 = vperm.xlu0 %437, %v416
        %v439 = vpop.permute.xlu0 %438
        %442 = vset.pattern.permute.xlu0 0
        %443 = vperm.xlu0 %442, %v417
        %v444 = vpop.permute.xlu0 %443
        %447 = vset.pattern.permute.xlu0 0
        %448 = vperm.xlu0 %447, %v418
        %v449 = vpop.permute.xlu0 %448
        %452 = vset.pattern.permute.xlu0 0
        %453 = vperm.xlu0 %452, %v419
        %v454 = vpop.permute.xlu0 %453
        %457 = vset.pattern.permute.xlu0 0
        %458 = vperm.xlu0 %457, %v420
        %v459 = vpop.permute.xlu0 %458
        %v477 = vunpack.c.l.b16 %v397
        %v478 = vunpack.c.h.b16 %v397
        %v479 = vunpack.c.l.b16 %v398
        %v480 = vunpack.c.h.b16 %v398
        %v481 = vunpack.c.l.b16 %v399
        %v482 = vunpack.c.h.b16 %v399
        %v483 = vunpack.c.l.b16 %v400
        %v484 = vunpack.c.h.b16 %v400
        %v485 = vunpack.c.l.b16 %v401
        %v486 = vunpack.c.h.b16 %v401
        %v487 = vunpack.c.l.b16 %v402
        %v488 = vunpack.c.h.b16 %v402
        %v489 = vunpack.c.l.b16 %v403
        %v490 = vunpack.c.h.b16 %v403
        %v491 = vunpack.c.l.b16 %v404
        %v492 = vunpack.c.h.b16 %v404
        %v493 = vunpack.c.l.b16 %v405
        %v494 = vunpack.c.h.b16 %v405
        %v495 = vunpack.c.l.b16 %v406
        %v496 = vunpack.c.h.b16 %v406
        %v497 = vunpack.c.l.b16 %v407
        %v498 = vunpack.c.h.b16 %v407
        %v499 = vunpack.c.l.b16 %v408
        %v500 = vunpack.c.h.b16 %v408
        %v501 = vunpack.c.l.b16 %v409
        %v502 = vunpack.c.h.b16 %v409
        %v503 = vunpack.c.l.b16 %v410
        %v504 = vunpack.c.h.b16 %v410
        %v505 = vunpack.c.l.b16 %v411
        %v506 = vunpack.c.h.b16 %v411
        %v507 = vunpack.c.l.b16 %v412
        %v508 = vunpack.c.h.b16 %v412
        %v509 = vpack.c.b16 %v481, %v477
        %v510 = vpack.c.b16 %v482, %v478
        %v511 = vpack.c.b16 %v483, %v479
        %v512 = vpack.c.b16 %v484, %v480
        %v513 = vpack.c.b16 %v489, %v485
        %v514 = vpack.c.b16 %v490, %v486
        %v515 = vpack.c.b16 %v491, %v487
        %v516 = vpack.c.b16 %v492, %v488
        %v517 = vpack.c.b16 %v497, %v493
        %v518 = vpack.c.b16 %v498, %v494
        %v519 = vpack.c.b16 %v499, %v495
        %v520 = vpack.c.b16 %v500, %v496
        %v521 = vpack.c.b16 %v505, %v501
        %v522 = vpack.c.b16 %v506, %v502
        %v523 = vpack.c.b16 %v507, %v503
        %v524 = vpack.c.b16 %v508, %v504
        %541 = vmatprep.subr.bf16.mxu0 %v366
        %542 = vmatpush1.bf16.xpose.msra.mxu0 %v365
        %543 = vmatprep.subr.bf16.mxu0 %v370
        %544 = vmatpush1.bf16.xpose.msra.mxu0 %v369
        %545 = vmatprep.subr.bf16.mxu0 %v374
        %546 = vmatpush1.bf16.xpose.msra.mxu0 %v373
        %547 = vmatprep.subr.bf16.mxu0 %v378
        %548 = vmatpush1.bf16.xpose.msra.mxu0 %v377
        %549 = vmatprep.subr.bf16.mxu0 %v382
        %550 = vmatpush1.bf16.xpose.msra.mxu0 %v381
        %551 = vmatprep.subr.bf16.mxu0 %v386
        %552 = vmatpush1.bf16.xpose.msra.mxu0 %v385
        %553 = vmatprep.subr.bf16.mxu0 %v390
        %554 = vmatpush1.bf16.xpose.msra.mxu0 %v389
        %555 = vmatprep.subr.bf16.mxu0 %v394
        %556 = vmatpush1.bf16.xpose.msra.mxu0 %v393
        %557 = vmatprep.subr.bf16.mxu0 0
        %558 = vmatpush1.bf16.xpose.msra.mxu0 0
        %559 = vmatprep.subr.bf16.mxu0 0
        %560 = vmatpush1.bf16.xpose.msra.mxu0 0
        %561 = vmatprep.subr.bf16.mxu0 0
        %562 = vmatpush1.bf16.xpose.msra.mxu0 0
        %563 = vmatprep.subr.bf16.mxu0 0
        %564 = vmatpush1.bf16.xpose.msra.mxu0 0
        %565 = vmatprep.subr.bf16.mxu0 0
        %566 = vmatpush1.bf16.xpose.msra.mxu0 0
        %567 = vmatprep.subr.bf16.mxu0 0
        %568 = vmatpush1.bf16.xpose.msra.mxu0 0
        %569 = vmatprep.subr.bf16.mxu0 0
        %570 = vmatpush1.bf16.xpose.msra.mxu0 0
        %571 = vmatprep.subr.bf16.mxu0 0
        %572 = vmatpush1.bf16.xpose.msra.mxu0 0
        %573 = vmatprep.mubr.bf16.mxu0 %v510
        %574 = vmatmul.mubr.bf16.gmra.mrb[0].mxu0 %v509
        %v575 = vpop.f32.mrb[0].mxu0
        %v576 = vadd.f32 %v424, %v575
        %v577 = vpop.f32.mrb[0].mxu0
        %v578 = vpop.f32.mrb[0].mxu0
        %v579 = vadd.f32 %v429, %v578
        %v580 = vpop.f32.mrb[0].mxu0
        %581 = vmatprep.mubr.bf16.mxu0 %v514
        %582 = vmatmul.mubr.bf16.gmra.mrb[0].mxu0 %v513
        %v583 = vpop.f32.mrb[0].mxu0
        %v584 = vadd.f32 %v434, %v583
        %v585 = vpop.f32.mrb[0].mxu0
        %v586 = vpop.f32.mrb[0].mxu0
        %v587 = vadd.f32 %v439, %v586
        %v588 = vpop.f32.mrb[0].mxu0
        %589 = vmatprep.mubr.bf16.mxu0 %v518
        %590 = vmatmul.mubr.bf16.gmra.mrb[0].mxu0 %v517
        %v591 = vpop.f32.mrb[0].mxu0
        %v592 = vadd.f32 %v444, %v591
        %v593 = vpop.f32.mrb[0].mxu0
        %v594 = vpop.f32.mrb[0].mxu0
        %v595 = vadd.f32 %v449, %v594
        %v596 = vpop.f32.mrb[0].mxu0
        %597 = vmatprep.mubr.bf16.mxu0 %v522
        %598 = vmatmul.mubr.bf16.gmra.mrb[0].mxu0 %v521
        %v599 = vpop.f32.mrb[0].mxu0
        %v600 = vadd.f32 %v454, %v599
        %v601 = vpop.f32.mrb[0].mxu0
        %v602 = vpop.f32.mrb[0].mxu0
        %v603 = vadd.f32 %v459, %v602
        %v604 = vpop.f32.mrb[0].mxu0
        %605 = vdwg.mxu0
        %606 = vmatprep.subr.bf16.mxu0 %v368
        %607 = vmatpush1.bf16.xpose.msra.mxu0 %v367
        %608 = vmatprep.subr.bf16.mxu0 %v372
        %609 = vmatpush1.bf16.xpose.msra.mxu0 %v371
        %610 = vmatprep.subr.bf16.mxu0 %v376
        %611 = vmatpush1.bf16.xpose.msra.mxu0 %v375
        %612 = vmatprep.subr.bf16.mxu0 %v380
        %613 = vmatpush1.bf16.xpose.msra.mxu0 %v379
        %614 = vmatprep.subr.bf16.mxu0 %v384
        %615 = vmatpush1.bf16.xpose.msra.mxu0 %v383
        %616 = vmatprep.subr.bf16.mxu0 %v388
        %617 = vmatpush1.bf16.xpose.msra.mxu0 %v387
        %618 = vmatprep.subr.bf16.mxu0 %v392
        %619 = vmatpush1.bf16.xpose.msra.mxu0 %v391
        %620 = vmatprep.subr.bf16.mxu0 %v396
        %621 = vmatpush1.bf16.xpose.msra.mxu0 %v395
        %622 = vmatprep.subr.bf16.mxu0 0
        %623 = vmatpush1.bf16.xpose.msra.mxu0 0
        %624 = vmatprep.subr.bf16.mxu0 0
        %625 = vmatpush1.bf16.xpose.msra.mxu0 0
        %626 = vmatprep.subr.bf16.mxu0 0
        %627 = vmatpush1.bf16.xpose.msra.mxu0 0
        %628 = vmatprep.subr.bf16.mxu0 0
        %629 = vmatpush1.bf16.xpose.msra.mxu0 0
        %630 = vmatprep.subr.bf16.mxu0 0
        %631 = vmatpush1.bf16.xpose.msra.mxu0 0
        %632 = vmatprep.subr.bf16.mxu0 0
        %633 = vmatpush1.bf16.xpose.msra.mxu0 0
        %634 = vmatprep.subr.bf16.mxu0 0
        %635 = vmatpush1.bf16.xpose.msra.mxu0 0
        %636 = vmatprep.subr.bf16.mxu0 0
        %637 = vmatpush1.bf16.xpose.msra.mxu0 0
        %638 = vmatprep.mubr.bf16.mxu0 %v512
        %639 = vmatmul.mubr.bf16.gmra.mrb[0].mxu0 %v511
        %v640 = vpop.f32.mrb[0].mxu0
        %v641 = vadd.f32 %v576, %v640
        %v642 = vpop.f32.mrb[0].mxu0
        %v643 = vpop.f32.mrb[0].mxu0
        %v644 = vadd.f32 %v579, %v643
        %v645 = vpop.f32.mrb[0].mxu0
        %646 = vmatprep.mubr.bf16.mxu0 %v516
        %647 = vmatmul.mubr.bf16.gmra.mrb[0].mxu0 %v515
        %v648 = vpop.f32.mrb[0].mxu0
        %v649 = vadd.f32 %v584, %v648
        %v650 = vpop.f32.mrb[0].mxu0
        %v651 = vpop.f32.mrb[0].mxu0
        %v652 = vadd.f32 %v587, %v651
        %v653 = vpop.f32.mrb[0].mxu0
        %654 = vmatprep.mubr.bf16.mxu0 %v520
        %655 = vmatmul.mubr.bf16.gmra.mrb[0].mxu0 %v519
        %v656 = vpop.f32.mrb[0].mxu0
        %v657 = vadd.f32 %v592, %v656
        %v658 = vpop.f32.mrb[0].mxu0
        %v659 = vpop.f32.mrb[0].mxu0
        %v660 = vadd.f32 %v595, %v659
        %v661 = vpop.f32.mrb[0].mxu0
        %662 = vmatprep.mubr.bf16.mxu0 %v524
        %663 = vmatmul.mubr.bf16.gmra.mrb[0].mxu0 %v523
        %v664 = vpop.f32.mrb[0].mxu0
        %v665 = vadd.f32 %v600, %v664
        %v666 = vpop.f32.mrb[0].mxu0
        %v667 = vpop.f32.mrb[0].mxu0
        %v668 = vadd.f32 %v603, %v667
        %v669 = vpop.f32.mrb[0].mxu0
        %670 = vdwg.mxu0
        %v671 = vmul.f32 %v641, 0.5
        %v672 = vmul.f32 %v644, 0.5
        %v673 = vmul.f32 %v649, 0.5
        %v674 = vmul.f32 %v652, 0.5
        %v675 = vmul.f32 %v657, 0.5
        %v676 = vmul.f32 %v660, 0.5
        %v677 = vmul.f32 %v665, 0.5
        %v678 = vmul.f32 %v668, 0.5
        %v679 = vmul.f32 %v641, 0.70710677
        %v680 = vmul.f32 %v644, 0.70710677
        %v681 = vmul.f32 %v649, 0.70710677
        %v682 = vmul.f32 %v652, 0.70710677
        %v683 = vmul.f32 %v657, 0.70710677
        %v684 = vmul.f32 %v660, 0.70710677
        %v685 = vmul.f32 %v665, 0.70710677
        %v686 = vmul.f32 %v668, 0.70710677
        %v687 = verf.f32.pop %v679
        %v688 = verf.f32.pop %v680
        %v689 = verf.f32.pop %v681
        %v690 = verf.f32.pop %v682
        %v691 = verf.f32.pop %v683
        %v692 = verf.f32.pop %v684
        %v693 = verf.f32.pop %v685
        %v694 = verf.f32.pop %v686
        %v695 = vadd.f32 %v687, 1.0
        %v696 = vadd.f32 %v688, 1.0
        %v697 = vadd.f32 %v689, 1.0
        %v698 = vadd.f32 %v690, 1.0
        %v699 = vadd.f32 %v691, 1.0
        %v700 = vadd.f32 %v692, 1.0
        %v701 = vadd.f32 %v693, 1.0
        %v702 = vadd.f32 %v694, 1.0
        %v703 = vmul.f32 %v671, %v695
        %v704 = vmul.f32 %v672, %v696
        %v705 = vmul.f32 %v673, %v697
        %v706 = vmul.f32 %v674, %v698
        %v707 = vmul.f32 %v675, %v699
        %v708 = vmul.f32 %v676, %v700
        %v709 = vmul.f32 %v677, %v701
        %v710 = vmul.f32 %v678, %v702
        %v711 = vld [vmem:[%s3] sm:$0xff]
        %v712 = vld [vmem:[%s4] sm:$0xff]
        %714 = vset.pattern.permute.xlu0 0
        %715 = vperm.xlu0 %714, %v712
        %v716 = vpop.permute.xlu0 %715
        %vm718 = vcmask 523264
        %v720 = vsel %vm718, %v711, 0
        %722 = vmatprep.subr.mxu0 0.0
        %723 = vmatpush1.msra.mxu0 %v703
        %724 = vmatprep.subr.mxu0 0.0
        %725 = vmatpush1.msra.mxu0 %v704
        %726 = vmatprep.subr.mxu0 0.0
        %727 = vmatpush1.msra.mxu0 %v705
        %728 = vmatprep.subr.mxu0 0.0
        %729 = vmatpush1.msra.mxu0 %v706
        %730 = vmatprep.subr.mxu0 0.0
        %731 = vmatpush1.msra.mxu0 %v707
        %732 = vmatprep.subr.mxu0 0.0
        %733 = vmatpush1.msra.mxu0 %v708
        %734 = vmatprep.subr.mxu0 0.0
        %735 = vmatpush1.msra.mxu0 %v709
        %736 = vmatprep.subr.mxu0 0.0
        %737 = vmatpush1.msra.mxu0 %v710
        %738 = vmatprep.subr.mxu0 0.0
        %739 = vmatpush1.msra.mxu0 0.0
        %740 = vmatprep.subr.mxu0 0.0
        %741 = vmatpush1.msra.mxu0 0.0
        %742 = vmatprep.subr.mxu0 0.0
        %743 = vmatpush1.msra.mxu0 0.0
        %744 = vmatprep.subr.mxu0 0.0
        %745 = vmatpush1.msra.mxu0 0.0
        %746 = vmatprep.subr.mxu0 0.0
        %747 = vmatpush1.msra.mxu0 0.0
        %748 = vmatprep.subr.mxu0 0.0
        %749 = vmatpush1.msra.mxu0 0.0
        %750 = vmatprep.subr.mxu0 0.0
        %751 = vmatpush1.msra.mxu0 0.0
        %752 = vmatprep.subr.mxu0 0.0
        %753 = vmatpush1.msra.mxu0 0.0
        %754 = vmatprep.subr.mxu0 0.0
        %755 = vmatpush1.msra.mxu0 0.0
        %756 = vmatprep.subr.mxu0 0.0
        %757 = vmatpush1.msra.mxu0 0.0
        %758 = vmatprep.subr.mxu0 0.0
        %759 = vmatpush1.msra.mxu0 0.0
        %760 = vmatprep.subr.mxu0 0.0
        %761 = vmatpush1.msra.mxu0 0.0
        %762 = vmatprep.subr.mxu0 0.0
        %763 = vmatpush1.msra.mxu0 0.0
        %764 = vmatprep.subr.mxu0 0.0
        %765 = vmatpush1.msra.mxu0 0.0
        %766 = vmatprep.subr.mxu0 0.0
        %767 = vmatpush1.msra.mxu0 0.0
        %768 = vmatprep.subr.mxu0 0.0
        %769 = vmatpush1.msra.mxu0 0.0
        %770 = vmatprep.subr.mxu0 0.0
        %771 = vmatpush1.msra.mxu0 0.0
        %772 = vmatprep.subr.mxu0 0.0
        %773 = vmatpush1.msra.mxu0 0.0
        %774 = vmatprep.subr.mxu0 0.0
        %775 = vmatpush1.msra.mxu0 0.0
        %776 = vmatprep.subr.mxu0 0.0
        %777 = vmatpush1.msra.mxu0 0.0
        %778 = vmatprep.subr.mxu0 0.0
        %779 = vmatpush1.msra.mxu0 0.0
        %780 = vmatprep.subr.mxu0 0.0
        %781 = vmatpush1.msra.mxu0 0.0
        %782 = vmatprep.subr.mxu0 0.0
        %783 = vmatpush1.msra.mxu0 0.0
        %784 = vmatprep.subr.mxu0 0.0
        %785 = vmatpush1.msra.mxu0 0.0
        %786 = vmatprep.mubr.f32.mxu0 0.0
        %787 = vmatmul.mubr.f32.gmra.mrb[0].mxu0 %v720
        %v788 = vpop.f32.mrb[0].mxu0
        %v789 = vadd.f32 %v716, %v788
        %v790 = vpop.f32.mrb[0].mxu0
        %791 = vdwg.mxu0
        %v792 = vmul.f32 %v789, 0.5
        %v793 = vmul.f32 %v789, 0.70710677
        %v794 = verf.f32.pop %v793
        %v795 = vadd.f32 %v794, 1.0
        %v796 = vmul.f32 %v792, %v795
        %v797 = vld [vmem:[%s5] sm:$0xff]
        %799 = vset.pattern.permute.xlu0 0
        %800 = vperm.xlu0 %799, %v797
        %v801 = vpop.permute.xlu0 %800
        %v803 = vmul.f32 %v796, %v801
        %v804 = vrot.slane %v803, 4
        %v805 = vadd.f32 %v803, %v804
        %v806 = vrot.slane %v805, 2
        %v807 = vadd.f32 %v805, %v806
        %v808 = vrot.slane %v807, 1
        %v809 = vadd.f32 %v807, %v808
        %v810 = vld [vmem:[#allocation2] sm:$0x1]
        %812 = vset.pattern.permute.xlu0 0
        %813 = vperm.xlu0 %812, %v810
        %v814 = vpop.permute.xlu0 %813
        %v816 = vlaneseq
        %v817 = vshrl.u32 %v816, 7
        %v818 = vsub.s32 0, %v817
        %v819 = vrot.slane %v814, %v818
        %v820 = vadd.f32 %v809, %v819
        %821 = vst [vmem:[%s298] sm:$0x1] %v820
        %s822 = sand.u32 %s186, 1
        %s823 = scalar_lea.sflag [#allocation5], %s822
        %s824 = sand.u32 %s186, 1
        %s825 = scalar_lea.vmem [#allocation6], %s824
        // Predicated region
        $region53: #{mlp_classifier_forward.1} parent=47 // pred_check
          %p826 = pneg %p196
        $region54: #{mlp_classifier_forward.1} parent=47 // pred_check_branch
          %828 = sbr.rel (%p826) target = $region56
        $region55: #{mlp_classifier_forward.1} parent=47 // pred_region
          %s830 = ssub.s32 16, 16
          %831 = vsyncadd %s823, %s830
          %s832 = smul.addr %s26, 16
          %s833 = scalar_lea.hbm %s7, %s832
          %s835 = sshll.u32 %s825, 4
          %s836 = int_to_ptr.vmem [resolvable:$true] %s835
          %838 = dma.vmem_to_hbm [thread:$0]  %s836, 16, %s833, %s823
        $region56: #{mlp_classifier_forward.1} parent=47 // pred_fallthru
          _
      $region48: #{mlp_classifier_forward.1} parent=5 // pred_fallthru
        _
      %p839 = scmp.le.s32.totalorder 2, %s21
      // Predicated region
      $region57: #{mlp_classifier_forward.1} parent=5 // pred_check
        %p840 = pneg %p839
      $region58: #{mlp_classifier_forward.1} parent=5 // pred_check_branch
        %842 = sbr.rel (%p840) target = $region60
      $region59: #{mlp_classifier_forward.1} parent=5 // pred_region
        %s843 = ssub.s32 %s21, 2
        // Predicated region
        $region61: #{mlp_classifier_forward.1} parent=59 // pred_check
          %p844 = pneg %p202
        $region62: #{mlp_classifier_forward.1} parent=59 // pred_check_branch
          %846 = sbr.rel (%p844) target = $region64
        $region63: #{mlp_classifier_forward.1} parent=59 // pred_region
          %s847 = sand.u32 %s187, 1
          %s848 = scalar_lea.sflag [#allocation5], %s847
          %s849 = sand.u32 %s187, 1
          %s850 = scalar_lea.vmem [#allocation6], %s849
          %851 = dma.done %s848, 16
        $region64: #{mlp_classifier_forward.1} parent=59 // pred_fallthru
          _
      $region60: #{mlp_classifier_forward.1} parent=5 // pred_fallthru
        _
    $region6: #{mlp_classifier_forward.1} parent=1 // loop_footer
      %s25 = sadd.s32 1, %s21
    $region7: #{mlp_classifier_forward.1} parent=1 // loop_footer_branch
      %20 = sbr.rel target = $region3
    $region8: #{mlp_classifier_forward.1} parent=1 // loop_exit
      _
    %852 = vsyncpa [#allocation4], 1
    %s853 = scalar_lea.sflag [#allocation4], 1
    %854 = vsyncpa %s853, 1
    %855 = vsyncpa [#allocation5], 1
    %s856 = scalar_lea.sflag [#allocation5], 1
    %857 = vsyncpa %s856, 1

</llo_original>
